<compile_context>
chip_gen: v6e
topology: v6e:2x2x1
jax: 0.10.0
libtpu: 0.0.40
codegen_flags: <defaults>
</compile_context>

<pallas_src>
import functools
import math

import jax
import jax.numpy as jnp
from jax import lax
from jax.experimental import pallas as pl
from jax.experimental.pallas import tpu as pltpu

EPS = 1e-5
C = 32  # uniform channel width inside the fused kernel (max Cin/Cout of the model)


# ------------------------------------------------------------------ conv geometry

def _layer_taps(kh, kw, h, w):
    """Live (dy, dx) taps of a stride-1 PyTorch padding='same' conv.

    PyTorch pads (k-1)//2 low / k-1-(k-1)//2 high, so tap (ky, kx) reads input pixel
    (y + ky - pt, x + kx - pl).  Only offsets with |dy| <= h-1 and |dx| <= w-1 can ever
    overlap real data (dead-tap elimination).  Taps are ordered (dy asc, dx asc), i.e.
    the same order as the (ky, kx) rows of the packed weight matrix.
    """
    pt, plft = (kh - 1) // 2, (kw - 1) // 2
    dys = [ky - pt for ky in range(kh) if abs(ky - pt) <= h - 1]
    dxs = [kx - plft for kx in range(kw) if abs(kx - plft) <= w - 1]
    return [(dy, dx) for dy in dys for dx in dxs], pt, plft


# ------------------------------------------------------------------ fused kernel

def _make_kernel(n, h, w, geoms, roll_like_jnp):
    """geoms: per-layer (taps, k) with k = len(taps) * C."""
    m = n * h * w
    inv_m = 1.0 / m
    n_layers = len(geoms)

    def bn(x):  # training-mode BatchNorm2d (gamma=1, beta=0), biased batch variance
        mean = jnp.sum(x, axis=1, keepdims=True) * inv_m
        xc = x - mean
        var = jnp.sum(xc * xc, axis=1, keepdims=True) * inv_m
        return xc * lax.rsqrt(var + EPS)

    def kernel(x_ref, *refs):
        wrefs = refs[0:2 * n_layers:2]       # packed weights, (C, K) = (Cout, K)
        brefs = refs[1:2 * n_layers:2]       # biases, (C, 1)
        o_ref = refs[2 * n_layers]           # output slab, (C, m)
        im2_ref = refs[2 * n_layers + 1]     # im2col scratch, (K_max, m)

        # static lane -> (y, x) decode, hoisted out of all loops (powers of two -> shifts)
        pos = lax.broadcasted_iota(jnp.int32, (1, m), 1)
        ypos = (pos % (h * w)) // w
        xpos = pos % w

        act = x_ref[...]                     # (C, m) channel-major slab, resident in VMEM
        for li, (taps, k) in enumerate(geoms):
            y = bn(act)                      # fused BatchNorm2d

            # ---- im2col: one rolled + border-masked copy of the slab per live tap ----
            # Row block t holds y shifted by (dy, dx); positions that fall into the
            # 'same' padding halo are zeroed.  Every store is a fully aligned
            # (32 sublane x m lane) store; the shift itself is XLU work.
            for t, (dy, dx) in enumerate(taps):
                delta = dy * w + dx          # want shifted[:, i] = y[:, i + delta]
                if delta == 0:
                    shifted = y
                else:
                    shift = (-delta) % m if roll_like_jnp else delta % m
                    shifted = pltpu.roll(y, shift, axis=1)
                conds = []
                if dy > 0:
                    conds.append(ypos < h - dy)
                elif dy < 0:
                    conds.append(ypos >= -dy)
                if dx > 0:
                    conds.append(xpos < w - dx)
                elif dx < 0:
                    conds.append(xpos >= -dx)
                if conds:
                    valid = conds[0]
                    for cnd in conds[1:]:
                        valid = jnp.logical_and(valid, cnd)
                    shifted = jnp.where(valid, shifted, 0.0)
                im2_ref[t * C:(t + 1) * C, :] = shifted

            # ---- ONE lane-dense MXU matmul per layer: (C, K) @ (K, m) ----
            patch = im2_ref[...] if k == im2_ref.shape[0] else im2_ref[0:k, :]
            out = jnp.dot(wrefs[li][...], patch, preferred_element_type=jnp.float32)
            act = jnp.maximum(out + brefs[li][...], 0.0)     # bias + ReLU (VPU)

        o_ref[...] = bn(act)                 # trailing BatchNorm2d

    return kernel


# ------------------------------------------------------------------ weight packing

def _pack_params(params, h, w):
    """Slice live taps, zero-pad channels to C, and fold (dy, dx, cin) into the MXU
    contraction dim: each layer becomes W_packed(Cout=C, K) with K = kh_eff*kw_eff*C,
    rows ordered exactly like the in-kernel im2col rows (tap-major, cin minor)."""
    geoms, flat = [], []
    for wt, bs in params:
        kh, kw, ci, co = wt.shape
        taps, pt, plft = _layer_taps(kh, kw, h, w)
        dys = sorted({dy for dy, _ in taps})
        dxs = sorted({dx for _, dx in taps})
        kh_eff, kw_eff = len(dys), len(dxs)
        k = kh_eff * kw_eff * C
        geoms.append((tuple(taps), k))
        ky_lo, kx_lo = dys[0] + pt, dxs[0] + plft
        wlive = wt[ky_lo:ky_lo + kh_eff, kx_lo:kx_lo + kw_eff]         # (kh_eff, kw_eff, ci, co)
        wfull = (jnp.zeros((kh_eff, kw_eff, C, C), jnp.float32)
                 .at[:, :, :ci, :co].set(wlive))
        flat.append(wfull.reshape(k, C).T)                             # (Cout=C, K)
        flat.append(jnp.zeros((C, 1), jnp.float32).at[:co, 0].set(bs))
    return tuple(geoms), flat


# ------------------------------------------------------------------ roll-direction probe

_ROLL_PROBE = {}


def _roll_matches_jnp():
    """Eagerly probe (once) whether pltpu.roll follows jnp.roll's shift convention.

    The im2col shifts are direction-critical; this tiny probe makes the kernel
    independent of the convention of the underlying tpu rotate lowering.
    """
    if "v" not in _ROLL_PROBE:
        def probe(x_ref, o_ref):
            o_ref[...] = pltpu.roll(x_ref[...], 1, axis=1)

        x = jnp.arange(8 * 128, dtype=jnp.float32).reshape(8, 128)
        y = pl.pallas_call(
            probe, out_shape=jax.ShapeDtypeStruct((8, 128), jnp.float32))(x)
        _ROLL_PROBE["v"] = bool(jnp.array_equal(y, jnp.roll(x, 1, axis=1)))
    return _ROLL_PROBE["v"]


# ------------------------------------------------------------------ params / forward

def init_params(key, in_channel):
    k_filter = 32
    specs = [
        (5, 5, in_channel, k_filter // 2),
        (5, 5, k_filter // 2, k_filter),
        (5, 5, k_filter, k_filter),
        (5, 5, k_filter, k_filter),
        (70, 3, k_filter, k_filter),
        (70, 3, k_filter, k_filter),
    ]
    params = []
    for i, (kh, kw, cin, cout) in enumerate(specs):
        wkey, bkey = jax.random.split(jax.random.fold_in(key, i))
        bound = 1.0 / math.sqrt(kh * kw * cin)   # PyTorch Conv2d default init bounds
        wt = jax.random.uniform(wkey, (kh, kw, cin, cout), jnp.float32, -bound, bound)
        bs = jax.random.uniform(bkey, (cout,), jnp.float32, -bound, bound)
        params.append((wt, bs))
    return params


@functools.partial(jax.jit, static_argnums=(2,))
def _forward_jit(x_nchw, params, roll_like_jnp):
    xf = jnp.transpose(x_nchw, (1, 0, 2, 3)).astype(jnp.float32)     # (Cin, N, H, W)
    cin0, n, h, w = xf.shape
    assert cin0 <= C, "in_channel must be <= 32 for this packing"
    m = n * h * w

    # channel-major input slab, channel-padded to C: (C, M) with M lane-dense (512 = 4*128)
    x2d = jnp.zeros((C, m), jnp.float32).at[:cin0].set(xf.reshape(cin0, m))

    geoms, flat = _pack_params(params, h, w)
    k_max = max(k for _, k in geoms)                                   # 93 * 32 = 2976

    kernel = _make_kernel(n, h, w, geoms, roll_like_jnp)
    out2d = pl.pallas_call(
        kernel,
        out_shape=jax.ShapeDtypeStruct((C, m), jnp.float32),
        scratch_shapes=[pltpu.VMEM((k_max, m), jnp.float32)],          # im2col, ~6 MiB
        compiler_params=pltpu.CompilerParams(vmem_limit_bytes=24 * 1024 * 1024),
    )(x2d, *flat)

    co_last = params[-1][0].shape[-1]
    y = out2d[:co_last].reshape(co_last, n, h, w)
    return jnp.transpose(y, (1, 0, 2, 3)), x_nchw


def base_model_forward(x_nchw, params):
    """Forward of Base_model: returns (net(x), x) like the PyTorch module."""
    return _forward_jit(x_nchw, params, _roll_matches_jnp())


if __name__ == "__main__":
    key = jax.random.PRNGKey(0)
    in_channel = 4
    x = jax.random.normal(jax.random.fold_in(key, 123),
                          (2, in_channel, 16, 16), jnp.float32)        # NCHW
    params = init_params(key, in_channel)

    out, passthrough = base_model_forward(x, params)
    jax.block_until_ready(out)
    jax.block_until_ready(passthrough)

    assert out.shape == (2, 32, 16, 16), out.shape
    assert passthrough.shape == x.shape
    assert bool(jnp.all(jnp.isfinite(out)))
    print("KERNEL_OK")
</pallas_src>

<mosaic_0001>
module attributes {stable_mosaic.version = 11 : i64} {
  func.func @probe(%arg0: memref<8x128xf32, #tpu.memory_space<vmem>>, %arg1: memref<8x128xf32, #tpu.memory_space<vmem>>) attributes {dimension_semantics = [], scalar_prefetch = 0 : i64, scratch_operands = 0 : i64, tpu.core_type = #tpu.core_type<tc>} {
    %c0 = arith.constant 0 : index
    %c0_0 = arith.constant 0 : index
    %0 = vector.load %arg0[%c0, %c0_0] : memref<8x128xf32, #tpu.memory_space<vmem>>, vector<8x128xf32>
    %c1_i32 = arith.constant 1 : i32
    %1 = tpu.dynamic_rotate %0 by %c1_i32 dim 1 : vector<8x128xf32>, i32 -> vector<8x128xf32>
    %c0_1 = arith.constant 0 : index
    %c0_2 = arith.constant 0 : index
    %2 = vector.load %arg1[%c0_1, %c0_2] : memref<8x128xf32, #tpu.memory_space<vmem>>, vector<8x128xf32>
    tpu.vector_store %arg1[%c0_1, %c0_2], %1 {strides = array<i32>} : memref<8x128xf32, #tpu.memory_space<vmem>>, vector<8x128xf32>,
    return
  }
}

</mosaic_0001>

<llo_original>
// kernel: tpu_custom_call.1
$region0: #{tpu_custom_call.1}
  #allocation0 [shape = 'u32[]', space=smem, size = 0x4, offset = 0x4, fixed_abs, tag = 'smem constant byte address 0x4 - core index']
  #allocation1 [shape = 'u32[144,128]{1,0:T(1,128)}', space=vmem, size = 0x12000, scoped, tag = 'internal scratch']
  %s0 = inlined_call_operand.hbm [shape: f32[8,128], index: 0, kind: input, shape index: {}]
  %s1 = inlined_call_operand.hbm [shape: f32[8,128], index: 1, kind: output, shape index: {}]
  %s2 = sld [smem:[#allocation0]]
  $region18: #{tpu_custom_call.1} parent=0
    _
  %s4 = ssub.s32 1, %s2
  %s5 = scalar_select 0, %s4, %s2
  $region1: #{tpu_custom_call.1} parent=0
    #allocation2 [shape = 'u8[4096]{0}', space=vmem, size = 0x1000, scoped, tag = 'input window, operand 0, single buffered']
    #allocation3 [shape = 's32[1]{0}', space=sflag, size = 0x4, scoped, tag = 'scoped memory for tpu_custom_call.1']
    #allocation4 [shape = 's32[1]{0}', space=sflag, size = 0x4, scoped, tag = 'scoped memory for tpu_custom_call.1']
    #allocation5 [shape = 'u8[4096]{0}', space=vmem, size = 0x1000, scoped, tag = 'output window, operand 0, single buffered']
    %6 = vsyncpa [#allocation3], 0
    %7 = vsyncpa [#allocation4], 0
    // Predicated region
    $region2: #{tpu_custom_call.1} parent=1 // pred_check
      _
    $region3: #{tpu_custom_call.1} parent=1 // pred_check_branch
      %9 = sbr.rel (0) target = $region5
    $region4: #{tpu_custom_call.1} parent=1 // pred_region
      %s11 = ssub.s32 128, 128
      %12 = vsyncadd [#allocation3], %s11
      %s14 = sshll.u32 [#allocation2], 4
      %s15 = int_to_ptr.vmem [resolvable:$true] %s14
      %17 = dma.hbm_to_vmem [thread:$0]  %s0, 128, %s15, [#allocation3]
    $region5: #{tpu_custom_call.1} parent=1 // pred_fallthru
      _
    // Predicated region
    $region6: #{tpu_custom_call.1} parent=1 // pred_check
      _
    $region7: #{tpu_custom_call.1} parent=1 // pred_check_branch
      %19 = sbr.rel (0) target = $region9
    $region8: #{tpu_custom_call.1} parent=1 // pred_region
      %20 = dma.done [#allocation3], 128
    $region9: #{tpu_custom_call.1} parent=1 // pred_fallthru
      _
    %v21 = vld [vmem:[#allocation2] sm:$0xff]
    %22 = vrot.lane.b32.xlu0 %v21, 1
    %v23 = vpop.permute.xlu0 %22
    %24 = vst [vmem:[#allocation5] sm:$0xff] %v23
    // Predicated region
    $region10: #{tpu_custom_call.1} parent=1 // pred_check
      _
    $region11: #{tpu_custom_call.1} parent=1 // pred_check_branch
      %26 = sbr.rel (0) target = $region13
    $region12: #{tpu_custom_call.1} parent=1 // pred_region
      %s28 = ssub.s32 128, 128
      %29 = vsyncadd [#allocation4], %s28
      %s31 = sshll.u32 [#allocation5], 4
      %s32 = int_to_ptr.vmem [resolvable:$true] %s31
      %34 = dma.vmem_to_hbm [thread:$0]  %s32, 128, %s1, [#allocation4]
    $region13: #{tpu_custom_call.1} parent=1 // pred_fallthru
      _
    // Predicated region
    $region14: #{tpu_custom_call.1} parent=1 // pred_check
      _
    $region15: #{tpu_custom_call.1} parent=1 // pred_check_branch
      %36 = sbr.rel (0) target = $region17
    $region16: #{tpu_custom_call.1} parent=1 // pred_region
      %37 = dma.done [#allocation4], 128
    $region17: #{tpu_custom_call.1} parent=1 // pred_fallthru
      _
    %38 = vsyncpa [#allocation3], 1
    %39 = vsyncpa [#allocation4], 1

</llo_original>
